<compile_context>
chip_gen: v7x
topology: tpu7x:2x2x1
jax: 0.10.0
libtpu: 0.0.40
codegen_flags: <defaults>
</compile_context>

<pallas_src>
import jax
import jax.numpy as jnp
from jax import lax
from jax.experimental import pallas as pl
from jax.experimental.pallas import tpu as pltpu


_BLOCK_TARGET_BYTES = 4 * 1024 * 1024   # per-input block (input dtype bytes)
_CHUNK_TARGET_BYTES = 512 * 1024        # f32 temporary per inner accumulation chunk
_ACC_SUBLANES = 8                       # accumulator sublane rows (one f32 vreg group)


def _round_down(x, m):
    return (x // m) * m


def _round_up(x, m):
    return (x + m - 1) // m * m


def _min_sublane(dtype) -> int:
    """Minimum legal sublane tile for dtype (f32: 8, bf16: 16, int8/fp8: 32)."""
    return max(8, 32 // jnp.dtype(dtype).itemsize)


def _chip_info():
    """Return (tensorcores_per_device, vmem_limit_bytes) for the attached TPU."""
    try:
        kind = jax.devices()[0].device_kind.lower()
    except Exception:
        kind = ""
    if "v7" in kind:
        # v7x: 2 TensorCores / chip, only 64 MiB VMEM per TC -> keep budget tight.
        return 2, 40 * 1024 * 1024
    # v5e / v6e: single TensorCore, 128 MiB VMEM.
    return 1, 64 * 1024 * 1024


def _make_mse_kernel(C, row_tile, chunk, n_steps, rows_valid, needs_mask):
    """Build the per-block kernel. o_ref is a resident (8, C) f32 accumulator."""
    n_chunks = row_tile // chunk
    folds = chunk // _ACC_SUBLANES      # chunk is always a multiple of 8

    def kernel(x_ref, y_ref, o_ref):
        step = pl.program_id(1)

        @pl.when(step == 0)
        def _init():
            o_ref[...] = jnp.zeros_like(o_ref)

        # Intended absolute row of this block's first row (used only for masking;
        # independent of any index-map clamping of the actual DMA).
        block_row0 = (pl.program_id(0) * n_steps + step) * row_tile

        @pl.loop(0, n_chunks)
        def _per_chunk(ci):
            r0 = pl.multiple_of(ci * chunk, chunk)
            x = x_ref[pl.ds(r0, chunk), :].astype(jnp.float32)
            y = y_ref[pl.ds(r0, chunk), :].astype(jnp.float32)
            d = x - y
            sq = d * d
            if needs_mask:
                rows = (block_row0 + r0
                        + lax.broadcasted_iota(jnp.int32, (chunk, 1), 0))
                sq = jnp.where(rows < rows_valid, sq, 0.0)   # zero OOB garbage
            # Fold chunk rows down to 8 sublanes with pure VPU adds.
            o_ref[...] += jnp.sum(sq.reshape(folds, _ACC_SUBLANES, C), axis=0)

    return kernel


def mse_loss_pallas(logits, t_logits):
    """mean((logits - t_logits)**2) * 0.05 via a Pallas streaming reduction."""
    assert logits.shape == t_logits.shape, (logits.shape, t_logits.shape)
    n_elems = logits.size
    if n_elems == 0:
        return jnp.float32(jnp.nan)   # torch MSELoss(mean) on empty input -> nan

    # Copy-free view: collapse leading dims, keep the last dim as the lane axis.
    C = 1 if logits.ndim == 0 else logits.shape[-1]
    x2d = logits.reshape(-1, C)
    y2d = t_logits.reshape(-1, C)
    R = x2d.shape[0]

    min_sub = max(_min_sublane(x2d.dtype), _min_sublane(y2d.dtype))
    itemsize = max(jnp.dtype(x2d.dtype).itemsize, jnp.dtype(y2d.dtype).itemsize)

    # Degenerate tiny inputs (< one sublane tile of rows): pad a handful of zero
    # rows (zero diff -> contributes 0).  Never triggers for real workloads.
    if R < min_sub:
        pad = min_sub - R
        x2d = jnp.pad(x2d, ((0, pad), (0, 0)))
        y2d = jnp.pad(y2d, ((0, pad), (0, 0)))
        R = min_sub

    padded_C = _round_up(C, 128)
    row_bytes = padded_C * itemsize

    # Rows per inner accumulation chunk (bounds the in-kernel f32 temporary).
    chunk = max(min_sub,
                _round_down(_CHUNK_TARGET_BYTES // (padded_C * 4), min_sub))
    chunk = min(chunk, 1024, _round_down(R, min_sub))

    # Rows per pipelined block: ~4 MiB of the input dtype, multiple of chunk, <= R.
    row_tile = max(chunk, _round_down(_BLOCK_TARGET_BYTES // row_bytes, chunk))
    row_tile = min(row_tile, _round_down(R, chunk))

    n_blocks = pl.cdiv(R, row_tile)

    num_cores, vmem_limit = _chip_info()
    num_shards = min(num_cores, n_blocks)
    n_steps = pl.cdiv(n_blocks, num_shards)
    # Mask needed if the last block is partial or the rectangular grid has
    # extra (clamped) steps.
    needs_mask = (num_shards * n_steps * row_tile) != R
    max_block = n_blocks - 1

    if num_shards * n_steps == n_blocks:
        in_map = lambda c, i: (c * n_steps + i, 0)
    else:
        # Clamp so trailing "extra" grid steps re-read a valid block; their
        # contribution is fully masked to zero in the kernel.
        in_map = lambda c, i: (jnp.minimum(c * n_steps + i, max_block), 0)

    kernel = _make_mse_kernel(C, row_tile, chunk, n_steps, R, needs_mask)

    # Genuinely split the shard axis across v7x's two TensorCores.
    sem0 = pltpu.CORE_PARALLEL if num_shards > 1 else pltpu.ARBITRARY

    in_bytes = (x2d.size * jnp.dtype(x2d.dtype).itemsize
                + y2d.size * jnp.dtype(y2d.dtype).itemsize)
    cost = pl.CostEstimate(flops=3 * n_elems, transcendentals=0,
                           bytes_accessed=in_bytes + num_shards * 8 * C * 4)

    partials = pl.pallas_call(
        kernel,
        out_shape=jax.ShapeDtypeStruct((num_shards, _ACC_SUBLANES, C), jnp.float32),
        grid_spec=pltpu.PrefetchScalarGridSpec(
            num_scalar_prefetch=0,
            grid=(num_shards, n_steps),
            in_specs=[
                pl.BlockSpec((row_tile, C), in_map),
                pl.BlockSpec((row_tile, C), in_map),
            ],
            # One resident (8, C) f32 accumulator block per shard.
            out_specs=pl.BlockSpec((None, _ACC_SUBLANES, C), lambda c, i: (c, 0, 0)),
        ),
        compiler_params=pltpu.CompilerParams(
            dimension_semantics=(sem0, pltpu.ARBITRARY),
            vmem_limit_bytes=vmem_limit,
        ),
        cost_estimate=cost,
    )(x2d, y2d)

    # Single tiny final reduce (num_shards x 8 x C values) in plain JAX.
    mean_sq = jnp.sum(partials) / n_elems
    return mean_sq * jnp.float32(0.05)


def mse_module_forward(outputs_dict):
    """Mirrors MSE.forward: returns a dict with the scaled MSE loss."""
    # TODO(synk): LOSSES_REGISTRY / @configurable plumbing is framework boilerplate, not computation.
    t_logits = outputs_dict['T_G_LOGITS']
    logits = outputs_dict['G_LOGITS']
    loss = mse_loss_pallas(logits, t_logits)
    return {'MSE Loss(G)': loss}


if __name__ == "__main__":
    key = jax.random.PRNGKey(0)
    k1, k2 = jax.random.split(key)

    batch, seq, vocab = 2, 8, 128   # small synthetic logits
    logits = jax.random.normal(k1, (batch, seq, vocab), dtype=jnp.float32)
    t_logits = jax.random.normal(k2, (batch, seq, vocab), dtype=jnp.float32)

    ret = mse_module_forward({'G_LOGITS': logits, 'T_G_LOGITS': t_logits})
    loss = jax.block_until_ready(ret['MSE Loss(G)'])
    ref = jnp.mean((logits - t_logits) ** 2) * 0.05
    assert jnp.allclose(loss, ref, rtol=1e-5, atol=1e-6), (loss, ref)

    # Ragged shape: exercises the masked-tail path (no jnp.pad full copies).
    a = jax.random.normal(k1, (3, 7, 130), dtype=jnp.float32)
    b = jax.random.normal(k2, (3, 7, 130), dtype=jnp.float32)
    got = jax.block_until_ready(mse_loss_pallas(a, b))
    ref2 = jnp.mean((a - b) ** 2) * 0.05
    assert jnp.allclose(got, ref2, rtol=1e-5, atol=1e-6), (got, ref2)

    # bf16 inputs (halved HBM traffic); kernel accumulates in f32.
    abf = a.astype(jnp.bfloat16)
    bbf = b.astype(jnp.bfloat16)
    got_bf = jax.block_until_ready(mse_loss_pallas(abf, bbf))
    ref_bf = jnp.mean((abf.astype(jnp.float32) - bbf.astype(jnp.float32)) ** 2) * 0.05
    assert jnp.allclose(got_bf, ref_bf, rtol=1e-3, atol=1e-5), (got_bf, ref_bf)

    print("KERNEL_OK")
</pallas_src>

<mosaic_0001>
module attributes {stable_mosaic.version = 11 : i64} {
  func.func @kernel(%arg0: i32, %arg1: i32, %arg2: memref<16x128xf32, #tpu.memory_space<vmem>>, %arg3: memref<16x128xf32, #tpu.memory_space<vmem>>, %arg4: memref<1x8x128xf32, #tpu.memory_space<vmem>>) attributes {dimension_semantics = [#tpu.dimension_semantics<arbitrary>, #tpu.dimension_semantics<arbitrary>], iteration_bounds = array<i64: 1, 1>, scalar_prefetch = 0 : i64, scratch_operands = 0 : i64, tpu.core_type = #tpu.core_type<tc>, window_params = [{transform_indices = @transform_0, window_bounds = array<i64: 16, 128>}, {transform_indices = @transform_1, window_bounds = array<i64: 16, 128>}, {transform_indices = @transform_2, window_bounds = array<i64: 1, 8, 128>}]} {
    %c0_i32 = arith.constant 0 : i32
    %0 = arith.cmpi eq, %arg1, %c0_i32 : i32
    %1 = arith.extui %0 : i1 to i32
    %c0_i32_0 = arith.constant 0 : i32
    %2 = arith.cmpi ne, %1, %c0_i32_0 : i32
    scf.if %2 {
      %cst_11 = arith.constant 0.000000e+00 : f32
      %21 = vector.broadcast %cst_11 : f32 to vector<8x128xf32>
      %c0_12 = arith.constant 0 : index
      %c0_13 = arith.constant 0 : index
      %c0_14 = arith.constant 0 : index
      %22 = vector.load %arg4[%c0_12, %c0_13, %c0_14] : memref<1x8x128xf32, #tpu.memory_space<vmem>>, vector<1x8x128xf32>
      %23 = vector.shape_cast %22 : vector<1x8x128xf32> to vector<8x128xf32>
      %24 = vector.shape_cast %21 : vector<8x128xf32> to vector<1x8x128xf32>
      tpu.vector_store %arg4[%c0_12, %c0_13, %c0_14], %24 {strides = array<i32>} : memref<1x8x128xf32, #tpu.memory_space<vmem>>, vector<1x8x128xf32>,
    } else {
    }
    %c0_i32_1 = arith.constant 0 : i32
    %c1_i32 = arith.constant 1 : i32
    %3 = arith.muli %c0_i32_1, %c1_i32 : i32
    %c0_i32_2 = arith.constant 0 : i32
    %4 = arith.addi %c0_i32_2, %3 : i32
    %c16_i32 = arith.constant 16 : i32
    %5 = arith.muli %4, %c16_i32 : i32
    %6 = tpu.assume_multiple %5, 16 : i32
    %7 = arith.index_cast %6 : i32 to index
    %c0 = arith.constant 0 : index
    %8 = vector.load %arg2[%7, %c0] : memref<16x128xf32, #tpu.memory_space<vmem>>, vector<16x128xf32>
    %9 = arith.index_cast %6 : i32 to index
    %c0_3 = arith.constant 0 : index
    %10 = vector.load %arg3[%9, %c0_3] : memref<16x128xf32, #tpu.memory_space<vmem>>, vector<16x128xf32>
    %11 = arith.subf %8, %10 : vector<16x128xf32>
    %12 = arith.mulf %11, %11 : vector<16x128xf32>
    %c0_4 = arith.constant 0 : index
    %c0_5 = arith.constant 0 : index
    %c0_6 = arith.constant 0 : index
    %13 = vector.load %arg4[%c0_4, %c0_5, %c0_6] : memref<1x8x128xf32, #tpu.memory_space<vmem>>, vector<1x8x128xf32>
    %14 = vector.shape_cast %13 : vector<1x8x128xf32> to vector<8x128xf32>
    %15 = vector.shape_cast %12 : vector<16x128xf32> to vector<2x8x128xf32>
    %cst = arith.constant dense<0.000000e+00> : vector<8x128xf32>
    %16 = vector.multi_reduction <add>, %15, %cst [0] : vector<2x8x128xf32> to vector<8x128xf32>
    %17 = arith.addf %14, %16 : vector<8x128xf32>
    %c0_7 = arith.constant 0 : index
    %c0_8 = arith.constant 0 : index
    %c0_9 = arith.constant 0 : index
    %18 = vector.load %arg4[%c0_7, %c0_8, %c0_9] : memref<1x8x128xf32, #tpu.memory_space<vmem>>, vector<1x8x128xf32>
    %19 = vector.shape_cast %18 : vector<1x8x128xf32> to vector<8x128xf32>
    %20 = vector.shape_cast %17 : vector<8x128xf32> to vector<1x8x128xf32>
    tpu.vector_store %arg4[%c0_7, %c0_8, %c0_9], %20 {strides = array<i32>} : memref<1x8x128xf32, #tpu.memory_space<vmem>>, vector<1x8x128xf32>,
    %c1_i32_10 = arith.constant 1 : i32
    return
  }
  func.func @transform_0(%arg0: i32, %arg1: i32) -> (i32, i32) {
    %c1_i32 = arith.constant 1 : i32
    %0 = arith.muli %arg0, %c1_i32 : i32
    %1 = arith.addi %0, %arg1 : i32
    %c0_i32 = arith.constant 0 : i32
    %c0_i32_0 = arith.constant 0 : i32
    return %1, %c0_i32 : i32, i32
  }
  func.func @transform_1(%arg0: i32, %arg1: i32) -> (i32, i32) {
    %c1_i32 = arith.constant 1 : i32
    %0 = arith.muli %arg0, %c1_i32 : i32
    %1 = arith.addi %0, %arg1 : i32
    %c0_i32 = arith.constant 0 : i32
    %c0_i32_0 = arith.constant 0 : i32
    return %1, %c0_i32 : i32, i32
  }
  func.func @transform_2(%arg0: i32, %arg1: i32) -> (i32, i32, i32) {
    %c0_i32 = arith.constant 0 : i32
    %c0_i32_0 = arith.constant 0 : i32
    %c0_i32_1 = arith.constant 0 : i32
    return %arg0, %c0_i32, %c0_i32_0 : i32, i32, i32
  }
}

</mosaic_0001>

<llo_original>
// kernel: tpu_custom_call.1
$region0: #{tpu_custom_call.1}
  #allocation0 [shape = 'u32[]', space=smem, size = 0x4, offset = 0x4, fixed_abs, tag = 'smem constant byte address 0x4 - core index']
  #allocation1 [shape = 'u32[144,128]{1,0:T(1,128)}', space=vmem, size = 0x12000, scoped, tag = 'internal scratch']
  %s0 = inlined_call_operand.hbm [shape: f32[16,128], index: 0, kind: input, shape index: {}]
  %s1 = inlined_call_operand.hbm [shape: f32[16,128], index: 1, kind: input, shape index: {}]
  %s2 = inlined_call_operand.hbm [shape: f32[1,8,128], index: 2, kind: output, shape index: {}]
  %s3 = sld [smem:[#allocation0]]
  $region30: #{tpu_custom_call.1} parent=0
    _
  %s5 = ssub.s32 1, %s3
  %s6 = scalar_select 0, %s5, %s3
  $region1: #{tpu_custom_call.1} parent=0
    #allocation2 [shape = 'u8[8192]{0}', space=vmem, size = 0x2000, scoped, tag = 'input window, operand 0, single buffered']
    #allocation3 [shape = 's32[1]{0}', space=sflag, size = 0x4, scoped, tag = 'scoped memory for tpu_custom_call.1']
    #allocation4 [shape = 's32[1]{0}', space=sflag, size = 0x4, scoped, tag = 'scoped memory for tpu_custom_call.1']
    #allocation5 [shape = 'u8[8192]{0}', space=vmem, size = 0x2000, scoped, tag = 'input window, operand 1, single buffered']
    #allocation6 [shape = 's32[1]{0}', space=sflag, size = 0x4, scoped, tag = 'scoped memory for tpu_custom_call.1']
    #allocation7 [shape = 'u8[4096]{0}', space=vmem, size = 0x1000, scoped, tag = 'output window, operand 0, single buffered']
    %7 = vsyncpa [#allocation3], 0
    %8 = vsyncpa [#allocation6], 0
    %9 = vsyncpa [#allocation4], 0
    // Predicated region
    $region2: #{tpu_custom_call.1} parent=1 // pred_check
      _
    $region3: #{tpu_custom_call.1} parent=1 // pred_check_branch
      %11 = sbr.rel (0) target = $region5
    $region4: #{tpu_custom_call.1} parent=1 // pred_region
      %s12 = sadd.s32 0, 0
      %s13 = smul.u32 2, %s12
      %s15 = ssub.s32 256, 256
      %16 = vsyncadd [#allocation3], %s15
      %s17 = smul.addr %s13, 128
      %s18 = scalar_lea.hbm %s0, %s17
      %s19 = sshll.u32 [#allocation2], 4
      %s20 = int_to_ptr.vmem [resolvable:$true] %s19
      %25 = dma.hbm_to_vmem [thread:$0]  %s18, 256, %s20, [#allocation3], 128, 128, 8
    $region5: #{tpu_custom_call.1} parent=1 // pred_fallthru
      _
    // Predicated region
    $region6: #{tpu_custom_call.1} parent=1 // pred_check
      _
    $region7: #{tpu_custom_call.1} parent=1 // pred_check_branch
      %27 = sbr.rel (0) target = $region9
    $region8: #{tpu_custom_call.1} parent=1 // pred_region
      %s28 = sadd.s32 0, 0
      %s29 = smul.u32 2, %s28
      %s31 = ssub.s32 256, 256
      %32 = vsyncadd [#allocation6], %s31
      %s33 = smul.addr %s29, 128
      %s34 = scalar_lea.hbm %s1, %s33
      %s35 = sshll.u32 [#allocation5], 4
      %s36 = int_to_ptr.vmem [resolvable:$true] %s35
      %41 = dma.hbm_to_vmem [thread:$0]  %s34, 256, %s36, [#allocation6], 128, 128, 8
    $region9: #{tpu_custom_call.1} parent=1 // pred_fallthru
      _
    // Predicated region
    $region10: #{tpu_custom_call.1} parent=1 // pred_check
      _
    $region11: #{tpu_custom_call.1} parent=1 // pred_check_branch
      %43 = sbr.rel (0) target = $region13
    $region12: #{tpu_custom_call.1} parent=1 // pred_region
      %44 = dma.done [#allocation3], 256
    $region13: #{tpu_custom_call.1} parent=1 // pred_fallthru
      _
    // Predicated region
    $region14: #{tpu_custom_call.1} parent=1 // pred_check
      _
    $region15: #{tpu_custom_call.1} parent=1 // pred_check_branch
      %46 = sbr.rel (0) target = $region17
    $region16: #{tpu_custom_call.1} parent=1 // pred_region
      %47 = dma.done [#allocation6], 256
    $region17: #{tpu_custom_call.1} parent=1 // pred_fallthru
      _
    %s48 = sadd.s32 0, 0
    %s49 = smul.u32 2, %s48
    %s50 = sadd.s32 0, 0
    %s51 = smul.u32 2, %s50
    %p52 = scmp.eq.s32.totalorder 0, 0
    // Predicated region
    $region18: #{tpu_custom_call.1} parent=1 // pred_check
      %p53 = pneg %p52
    $region19: #{tpu_custom_call.1} parent=1 // pred_check_branch
      %55 = sbr.rel (%p53) target = $region21
    $region20: #{tpu_custom_call.1} parent=1 // pred_region
      %56 = vst [vmem:[#allocation7] sm:$0xff] 0.0
    $region21: #{tpu_custom_call.1} parent=1 // pred_fallthru
      _
    %v57 = vld [vmem:[#allocation2] sm:$0xff]
    %v58 = vld [vmem:[#allocation2 + $0x8] sm:$0xff]
    %v59 = vld [vmem:[#allocation5] sm:$0xff]
    %v60 = vld [vmem:[#allocation5 + $0x8] sm:$0xff]
    %v61 = vsub.f32 %v57, %v59
    %v62 = vsub.f32 %v58, %v60
    %v63 = vmul.f32 %v61, %v61
    %v64 = vmul.f32 %v62, %v62
    %v65 = vld [vmem:[#allocation7] sm:$0xff]
    %v66 = vadd.f32 %v63, %v64
    %v67 = vadd.f32 %v65, %v66
    %68 = vst [vmem:[#allocation7] sm:$0xff] %v67
    // Predicated region
    $region22: #{tpu_custom_call.1} parent=1 // pred_check
      _
    $region23: #{tpu_custom_call.1} parent=1 // pred_check_branch
      %70 = sbr.rel (0) target = $region25
    $region24: #{tpu_custom_call.1} parent=1 // pred_region
      %s72 = ssub.s32 128, 128
      %73 = vsyncadd [#allocation4], %s72
      %s75 = sshll.u32 [#allocation7], 4
      %s76 = int_to_ptr.vmem [resolvable:$true] %s75
      %78 = dma.vmem_to_hbm [thread:$0]  %s76, 128, %s2, [#allocation4]
    $region25: #{tpu_custom_call.1} parent=1 // pred_fallthru
      _
    // Predicated region
    $region26: #{tpu_custom_call.1} parent=1 // pred_check
      _
    $region27: #{tpu_custom_call.1} parent=1 // pred_check_branch
      %80 = sbr.rel (0) target = $region29
    $region28: #{tpu_custom_call.1} parent=1 // pred_region
      %81 = dma.done [#allocation4], 128
    $region29: #{tpu_custom_call.1} parent=1 // pred_fallthru
      _
    %82 = vsyncpa [#allocation3], 1
    %83 = vsyncpa [#allocation6], 1
    %84 = vsyncpa [#allocation4], 1

</llo_original>
